<compile_context>
chip_gen: v7x
topology: tpu7x:2x2x1
jax: 0.10.0
libtpu: 0.0.40
codegen_flags: <defaults>
</compile_context>

<pallas_src>
import math

import jax
import jax.numpy as jnp
from jax.experimental import pallas as pl
from jax.experimental.pallas import tpu as pltpu

D_MODEL = 128
N_HEAD = 8
HEAD_DIM = D_MODEL // N_HEAD
D_FF = 2048            # PyTorch TransformerEncoderLayer default dim_feedforward
N_LAYERS = 6
LN_EPS = 1e-5
PACK_W = 9 * D_MODEL + D_FF   # packed small-params width per layer (= 3200)


# --------------------- PositionalEncoding (the spec module) ---------------------

def _positional_encoding_kernel(x_ref, pe_ref, o_ref):
    # PositionalEncoding.forward: x + pe[:x.size(0)]
    # TODO(synk): Dropout(p=0.1) is identity here (inference/eval mode).
    o_ref[...] = x_ref[...] + pe_ref[...]


def positional_encoding(x, pe):
    """x: [S, B, D]; pe: [max_len, 1, D] sinusoidal buffer. Returns x + pe[:S]."""
    S, B, D = x.shape
    M = S * B
    # Lane/sublane-dense layout: flatten to [S*B, 128] (rows = s*B + b) instead of
    # blocking (S, B=2, D), which left 6/8 sublanes of every vreg empty.
    x_flat = x.reshape(M, D)                                  # free reshape, rows s*B+b
    pe_rows = jnp.repeat(pe[:S, 0, :], B, axis=0)             # pe_rows[s*B + b] = pe[s]
    out = pl.pallas_call(
        _positional_encoding_kernel,
        grid=(1,),                                            # one dense [M,128] block;
        in_specs=[pl.BlockSpec((M, D), lambda i: (0, 0)),     # tile rows for large S*B
                  pl.BlockSpec((M, D), lambda i: (0, 0))],
        out_specs=pl.BlockSpec((M, D), lambda i: (0, 0)),
        out_shape=jax.ShapeDtypeStruct((M, D), x.dtype),
    )(x_flat, pe_rows)
    return out.reshape(S, B, D)


# --------------------------- fused full-model kernel ----------------------------

def _layernorm(x, g, b, eps=LN_EPS):
    mu = jnp.mean(x, axis=-1, keepdims=True)
    xc = x - mu
    var = jnp.mean(xc * xc, axis=-1, keepdims=True)
    return xc * jax.lax.rsqrt(var + eps) * g + b


def _fused_forward_kernel(x_ref, pe_ref,
                          wqkv_ref, wo_ref, w1_ref, w2_ref, p_ref,
                          wcls_ref, bcls_ref,
                          out_ref,
                          x_scr, attn_scr):
    """grid = (batch, layer).  One batch's [S, D] activation lives in x_scr across layers."""
    l = pl.program_id(1)

    # ---- layer 0: apply PositionalEncoding (x + pe); dropout identity at eval ----
    @pl.when(l == 0)
    def _():
        x_scr[...] = x_ref[...] + pe_ref[...]

    x = x_scr[...]                                           # [S, D] f32

    # ---- unpack this layer's small params from the single packed DMA ----
    p = p_ref[0]                                             # [1, PACK_W] f32
    o = 0
    bqkv = p[:, o:o + 3 * D_MODEL]; o += 3 * D_MODEL
    bo   = p[:, o:o + D_MODEL];     o += D_MODEL
    ln1g = p[:, o:o + D_MODEL];     o += D_MODEL
    ln1b = p[:, o:o + D_MODEL];     o += D_MODEL
    b1   = p[:, o:o + D_FF];        o += D_FF
    b2   = p[:, o:o + D_MODEL];     o += D_MODEL
    ln2g = p[:, o:o + D_MODEL];     o += D_MODEL
    ln2b = p[:, o:o + D_MODEL];     o += D_MODEL

    # ---------------- multi-head self-attention (this batch, all heads) ----------------
    qkv = jnp.dot(x.astype(jnp.bfloat16), wqkv_ref[0],
                  preferred_element_type=jnp.float32) + bqkv          # [S, 3D] f32
    scale = 1.0 / math.sqrt(HEAD_DIM)

    # Per-head results are written straight into attn_scr at static lane offsets
    # (no list building / concatenates); batch parallelism comes from the grid.
    for h in range(N_HEAD):
        c = h * HEAD_DIM
        q = qkv[:, c:c + HEAD_DIM].astype(jnp.bfloat16)
        k = qkv[:, D_MODEL + c:D_MODEL + c + HEAD_DIM].astype(jnp.bfloat16)
        v = qkv[:, 2 * D_MODEL + c:2 * D_MODEL + c + HEAD_DIM].astype(jnp.bfloat16)
        s = jax.lax.dot_general(q, k, (((1,), (1,)), ((), ())),
                                preferred_element_type=jnp.float32) * scale   # [S, S] f32
        m = jnp.max(s, axis=-1, keepdims=True)
        pexp = jnp.exp(s - m)
        pexp = pexp * pl.reciprocal(jnp.sum(pexp, axis=-1, keepdims=True), approx=True)
        attn_scr[:, c:c + HEAD_DIM] = jnp.dot(pexp.astype(jnp.bfloat16), v,
                                              preferred_element_type=jnp.float32)

    attn = jnp.dot(attn_scr[...].astype(jnp.bfloat16), wo_ref[0],
                   preferred_element_type=jnp.float32) + bo
    # residual + LayerNorm 1 (post-norm; dropout identity at eval), f32 elementwise
    y = _layernorm(x + attn, ln1g, ln1b)

    # -------------------------------- feed-forward --------------------------------
    h1 = jnp.maximum(jnp.dot(y.astype(jnp.bfloat16), w1_ref[0],
                             preferred_element_type=jnp.float32) + b1, 0.0)   # [S, D_FF]
    h2 = jnp.dot(h1.astype(jnp.bfloat16), w2_ref[0],
                 preferred_element_type=jnp.float32) + b2                     # [S, D]
    y2 = _layernorm(y + h2, ln2g, ln2b)

    x_scr[...] = y2                                          # carry to the next layer

    # ------------- last layer: classifier + LogSoftmax over the seq axis -------------
    @pl.when(l == pl.num_programs(1) - 1)
    def _():
        logits = jnp.dot(y2.astype(jnp.bfloat16), wcls_ref[...],
                         preferred_element_type=jnp.float32) + bcls_ref[...]  # [S, V]
        # LogSoftmax over dim 0 of the [S, B, V] tensor == per-batch reduction over S.
        m = jnp.max(logits, axis=0, keepdims=True)
        lse = jnp.log(jnp.sum(jnp.exp(logits - m), axis=0, keepdims=True)) + m
        out_ref[...] = logits - lse


def transformer_forward(src, params):
    """src: [S, B] int32 token ids -> [S*B, token_num] log-probs (rows = s*B + b)."""
    S, B = src.shape
    V = params["W_cls"].shape[1]
    L = N_LAYERS

    # Embedding gather in XLA glue; gather directly in batch-major order so no activation
    # transpose is needed (rows of x0 are b*S + s).
    x0 = jnp.take(params["embedding"], src.T, axis=0).reshape(B * S, D_MODEL)
    pe = params["pe"][:S, 0, :]                              # [S, D]

    grid_spec = pltpu.PrefetchScalarGridSpec(
        num_scalar_prefetch=0,
        grid=(B, L),                                         # batch parallel, layer sequential
        in_specs=[
            pl.BlockSpec((S, D_MODEL), lambda b, l: (b, 0)),                 # x0 (per batch)
            pl.BlockSpec((S, D_MODEL), lambda b, l: (0, 0)),                 # pe (constant)
            pl.BlockSpec((1, D_MODEL, 3 * D_MODEL), lambda b, l: (l, 0, 0)), # Wqkv (bf16)
            pl.BlockSpec((1, D_MODEL, D_MODEL), lambda b, l: (l, 0, 0)),     # Wo   (bf16)
            pl.BlockSpec((1, D_MODEL, D_FF), lambda b, l: (l, 0, 0)),        # W1   (bf16)
            pl.BlockSpec((1, D_FF, D_MODEL), lambda b, l: (l, 0, 0)),        # W2   (bf16)
            pl.BlockSpec((1, 1, PACK_W), lambda b, l: (l, 0, 0)),            # packed small params
            pl.BlockSpec((D_MODEL, V), lambda b, l: (0, 0)),                 # W_cls (bf16)
            pl.BlockSpec((1, V), lambda b, l: (0, 0)),                       # b_cls
        ],
        # Output laid out [S, B*V]: block (S, V) per batch at lane offset b*V, so the final
        # .view(-1, V) row order (s*B + b) is a free reshape — no post-kernel transpose.
        out_specs=pl.BlockSpec((S, V), lambda b, l: (0, b)),
        scratch_shapes=[pltpu.VMEM((S, D_MODEL), jnp.float32),   # resident activation x_scr
                        pltpu.VMEM((S, D_MODEL), jnp.float32)],  # per-head attention assembly
    )
    # TODO(synk): on v7x, constant-index-map inputs (pe, W_cls, b_cls) could use
    # pipeline_mode=pl.Buffered(1) to save VMEM headroom; left default-buffered here.

    out = pl.pallas_call(
        _fused_forward_kernel,
        grid_spec=grid_spec,
        out_shape=jax.ShapeDtypeStruct((S, B * V), jnp.float32),
        compiler_params=pltpu.CompilerParams(
            dimension_semantics=("parallel", "arbitrary"),
        ),
    )(x0, pe,
      params["Wqkv"], params["Wo"], params["W1"], params["W2"],
      params["P_small"], params["W_cls"], params["b_cls"])

    # [S, B*V] -> [S*B, V]: pure reshape, rows already in PyTorch's .view(-1, V) order.
    return out.reshape(S * B, V)


# ------------------------------- parameters ----------------------------------

def init_params(key, token_num, max_len):
    def nrm(k, shape, scale=0.02, dtype=jnp.float32):
        return (scale * jax.random.normal(k, shape, dtype=jnp.float32)).astype(dtype)

    keys = iter(jax.random.split(key, 16))
    L = N_LAYERS
    params = {"embedding": nrm(next(keys), (token_num, D_MODEL))}

    # sinusoidal positional encoding buffer, exactly as PositionalEncoding.__init__
    position = jnp.arange(max_len, dtype=jnp.float32)[:, None]
    div_term = jnp.exp(jnp.arange(0, D_MODEL, 2, dtype=jnp.float32)
                       * (-math.log(10000.0) / D_MODEL))
    pe = jnp.zeros((max_len, 1, D_MODEL), dtype=jnp.float32)
    pe = pe.at[:, 0, 0::2].set(jnp.sin(position * div_term))
    pe = pe.at[:, 0, 1::2].set(jnp.cos(position * div_term))
    params["pe"] = pe

    # Matmul weights in bf16 (MXU inputs), stacked along the layer axis for streaming.
    params["Wqkv"] = nrm(next(keys), (L, D_MODEL, 3 * D_MODEL), dtype=jnp.bfloat16)
    params["Wo"]   = nrm(next(keys), (L, D_MODEL, D_MODEL), dtype=jnp.bfloat16)
    params["W1"]   = nrm(next(keys), (L, D_MODEL, D_FF), dtype=jnp.bfloat16)
    params["W2"]   = nrm(next(keys), (L, D_FF, D_MODEL), dtype=jnp.bfloat16)

    # Small per-layer params packed into ONE [L, 1, PACK_W] tensor (1 DMA/layer-step).
    bqkv = nrm(next(keys), (L, 1, 3 * D_MODEL))
    bo   = nrm(next(keys), (L, 1, D_MODEL))
    ln1g = jnp.ones((L, 1, D_MODEL), jnp.float32)
    ln1b = jnp.zeros((L, 1, D_MODEL), jnp.float32)
    b1   = nrm(next(keys), (L, 1, D_FF))
    b2   = nrm(next(keys), (L, 1, D_MODEL))
    ln2g = jnp.ones((L, 1, D_MODEL), jnp.float32)
    ln2b = jnp.zeros((L, 1, D_MODEL), jnp.float32)
    params["P_small"] = jnp.concatenate(
        [bqkv, bo, ln1g, ln1b, b1, b2, ln2g, ln2b], axis=-1)       # [L, 1, 3200]
    assert params["P_small"].shape[-1] == PACK_W

    params["W_cls"] = nrm(next(keys), (D_MODEL, token_num), dtype=jnp.bfloat16)
    params["b_cls"] = nrm(next(keys), (1, token_num))
    return params


if __name__ == "__main__":
    TOKEN_NUM = 256
    MAX_LEN = 16
    SEQ = 8
    BATCH = 2

    key = jax.random.PRNGKey(0)
    pkey, skey = jax.random.split(key)
    params = init_params(pkey, TOKEN_NUM, MAX_LEN)
    src = jax.random.randint(skey, (SEQ, BATCH), 0, TOKEN_NUM, dtype=jnp.int32)

    # 1) The spec module itself (PositionalEncoding.forward) as a standalone Pallas kernel.
    emb = jnp.take(params["embedding"], src, axis=0)               # [S, B, D]
    pe_out = jax.block_until_ready(positional_encoding(emb, params["pe"]))
    assert pe_out.shape == (SEQ, BATCH, D_MODEL)
    ref = emb + params["pe"][:SEQ]
    assert bool(jnp.allclose(pe_out, ref, atol=1e-6))

    # 2) Fused full-model forward (single pallas_call, grid=(B, L)).
    fwd = jax.jit(transformer_forward)
    out = jax.block_until_ready(fwd(src, params))
    assert out.shape == (SEQ * BATCH, TOKEN_NUM)
    assert bool(jnp.all(jnp.isfinite(out)))
    # LogSoftmax over the sequence axis: exp(out) summed over S must be ~1.
    probs = jnp.exp(out.reshape(SEQ, BATCH, TOKEN_NUM)).sum(axis=0)
    assert bool(jnp.allclose(probs, 1.0, atol=1e-2))
    print("KERNEL_OK")
</pallas_src>

<mosaic_0001>
module attributes {stable_mosaic.version = 11 : i64} {
  func.func @_positional_encoding_kernel(%arg0: i32, %arg1: memref<16x128xf32, #tpu.memory_space<vmem>>, %arg2: memref<16x128xf32, #tpu.memory_space<vmem>>, %arg3: memref<16x128xf32, #tpu.memory_space<vmem>>) attributes {dimension_semantics = [#tpu.dimension_semantics<arbitrary>], iteration_bounds = array<i64: 1>, scalar_prefetch = 0 : i64, scratch_operands = 0 : i64, tpu.core_type = #tpu.core_type<tc>, window_params = [{pipeline_mode = #tpu.pipeline_mode<synchronous>, transform_indices = @transform_0, window_bounds = array<i64: 16, 128>}, {pipeline_mode = #tpu.pipeline_mode<synchronous>, transform_indices = @transform_1, window_bounds = array<i64: 16, 128>}, {pipeline_mode = #tpu.pipeline_mode<synchronous>, transform_indices = @transform_2, window_bounds = array<i64: 16, 128>}]} {
    %c0 = arith.constant 0 : index
    %c0_0 = arith.constant 0 : index
    %0 = vector.load %arg1[%c0, %c0_0] : memref<16x128xf32, #tpu.memory_space<vmem>>, vector<16x128xf32>
    %c0_1 = arith.constant 0 : index
    %c0_2 = arith.constant 0 : index
    %1 = vector.load %arg2[%c0_1, %c0_2] : memref<16x128xf32, #tpu.memory_space<vmem>>, vector<16x128xf32>
    %2 = arith.addf %0, %1 : vector<16x128xf32>
    %c0_3 = arith.constant 0 : index
    %c0_4 = arith.constant 0 : index
    %3 = vector.load %arg3[%c0_3, %c0_4] : memref<16x128xf32, #tpu.memory_space<vmem>>, vector<16x128xf32>
    tpu.vector_store %arg3[%c0_3, %c0_4], %2 {strides = array<i32>} : memref<16x128xf32, #tpu.memory_space<vmem>>, vector<16x128xf32>,
    return
  }
  func.func @transform_0(%arg0: i32) -> (i32, i32) {
    %c0_i32 = arith.constant 0 : i32
    %c0_i32_0 = arith.constant 0 : i32
    %c0_i32_1 = arith.constant 0 : i32
    return %c0_i32, %c0_i32_0 : i32, i32
  }
  func.func @transform_1(%arg0: i32) -> (i32, i32) {
    %c0_i32 = arith.constant 0 : i32
    %c0_i32_0 = arith.constant 0 : i32
    %c0_i32_1 = arith.constant 0 : i32
    return %c0_i32, %c0_i32_0 : i32, i32
  }
  func.func @transform_2(%arg0: i32) -> (i32, i32) {
    %c0_i32 = arith.constant 0 : i32
    %c0_i32_0 = arith.constant 0 : i32
    %c0_i32_1 = arith.constant 0 : i32
    return %c0_i32, %c0_i32_0 : i32, i32
  }
}

</mosaic_0001>

<llo_original>
// kernel: tpu_custom_call.1
$region0: #{tpu_custom_call.1}
  #allocation0 [shape = 'u32[]', space=smem, size = 0x4, offset = 0x4, fixed_abs, tag = 'smem constant byte address 0x4 - core index']
  #allocation1 [shape = 'u32[144,128]{1,0:T(1,128)}', space=vmem, size = 0x12000, scoped, tag = 'internal scratch']
  %s0 = inlined_call_operand.hbm [shape: f32[16,128], index: 0, kind: input, shape index: {}]
  %s1 = inlined_call_operand.hbm [shape: f32[16,128], index: 1, kind: input, shape index: {}]
  %s2 = inlined_call_operand.hbm [shape: f32[16,128], index: 2, kind: output, shape index: {}]
  %s3 = sld [smem:[#allocation0]]
  $region26: #{tpu_custom_call.1} parent=0
    _
  %s5 = ssub.s32 1, %s3
  %s6 = scalar_select 0, %s5, %s3
  $region1: #{tpu_custom_call.1} parent=0
    #allocation2 [shape = 'u8[8192]{0}', space=vmem, size = 0x2000, scoped, tag = 'input window, operand 0, single buffered']
    #allocation3 [shape = 's32[1]{0}', space=sflag, size = 0x4, scoped, tag = 'scoped memory for tpu_custom_call.1']
    #allocation4 [shape = 's32[1]{0}', space=sflag, size = 0x4, scoped, tag = 'scoped memory for tpu_custom_call.1']
    #allocation5 [shape = 'u8[8192]{0}', space=vmem, size = 0x2000, scoped, tag = 'input window, operand 1, single buffered']
    #allocation6 [shape = 's32[1]{0}', space=sflag, size = 0x4, scoped, tag = 'scoped memory for tpu_custom_call.1']
    #allocation7 [shape = 'u8[8192]{0}', space=vmem, size = 0x2000, scoped, tag = 'output window, operand 0, single buffered']
    %7 = vsyncpa [#allocation3], 0
    %8 = vsyncpa [#allocation6], 0
    %9 = vsyncpa [#allocation4], 0
    // Predicated region
    $region2: #{tpu_custom_call.1} parent=1 // pred_check
      _
    $region3: #{tpu_custom_call.1} parent=1 // pred_check_branch
      %11 = sbr.rel (0) target = $region5
    $region4: #{tpu_custom_call.1} parent=1 // pred_region
      %s13 = ssub.s32 256, 256
      %14 = vsyncadd [#allocation3], %s13
      %s15 = sshll.u32 [#allocation2], 4
      %s16 = int_to_ptr.vmem [resolvable:$true] %s15
      %21 = dma.hbm_to_vmem [thread:$0]  %s0, 256, %s16, [#allocation3], 128, 128, 8
    $region5: #{tpu_custom_call.1} parent=1 // pred_fallthru
      _
    // Predicated region
    $region6: #{tpu_custom_call.1} parent=1 // pred_check
      _
    $region7: #{tpu_custom_call.1} parent=1 // pred_check_branch
      %23 = sbr.rel (0) target = $region9
    $region8: #{tpu_custom_call.1} parent=1 // pred_region
      %s25 = ssub.s32 256, 256
      %26 = vsyncadd [#allocation6], %s25
      %s27 = sshll.u32 [#allocation5], 4
      %s28 = int_to_ptr.vmem [resolvable:$true] %s27
      %33 = dma.hbm_to_vmem [thread:$0]  %s1, 256, %s28, [#allocation6], 128, 128, 8
    $region9: #{tpu_custom_call.1} parent=1 // pred_fallthru
      _
    // Predicated region
    $region10: #{tpu_custom_call.1} parent=1 // pred_check
      _
    $region11: #{tpu_custom_call.1} parent=1 // pred_check_branch
      %35 = sbr.rel (0) target = $region13
    $region12: #{tpu_custom_call.1} parent=1 // pred_region
      %36 = dma.done [#allocation3], 256
    $region13: #{tpu_custom_call.1} parent=1 // pred_fallthru
      _
    // Predicated region
    $region14: #{tpu_custom_call.1} parent=1 // pred_check
      _
    $region15: #{tpu_custom_call.1} parent=1 // pred_check_branch
      %38 = sbr.rel (0) target = $region17
    $region16: #{tpu_custom_call.1} parent=1 // pred_region
      %39 = dma.done [#allocation6], 256
    $region17: #{tpu_custom_call.1} parent=1 // pred_fallthru
      _
    %v40 = vld [vmem:[#allocation2] sm:$0xff]
    %v41 = vld [vmem:[#allocation2 + $0x8] sm:$0xff]
    %v42 = vld [vmem:[#allocation5] sm:$0xff]
    %v43 = vld [vmem:[#allocation5 + $0x8] sm:$0xff]
    %v44 = vadd.f32 %v40, %v42
    %v45 = vadd.f32 %v41, %v43
    %46 = vst [vmem:[#allocation7] sm:$0xff] %v44
    %47 = vst [vmem:[#allocation7 + $0x8] sm:$0xff] %v45
    // Predicated region
    $region18: #{tpu_custom_call.1} parent=1 // pred_check
      _
    $region19: #{tpu_custom_call.1} parent=1 // pred_check_branch
      %49 = sbr.rel (0) target = $region21
    $region20: #{tpu_custom_call.1} parent=1 // pred_region
      %s51 = ssub.s32 256, 256
      %52 = vsyncadd [#allocation4], %s51
      %s53 = sshll.u32 [#allocation7], 4
      %s54 = int_to_ptr.vmem [resolvable:$true] %s53
      %59 = dma.vmem_to_hbm [thread:$0]  %s54, 256, %s2, [#allocation4], 128, 128, 8
    $region21: #{tpu_custom_call.1} parent=1 // pred_fallthru
      _
    // Predicated region
    $region22: #{tpu_custom_call.1} parent=1 // pred_check
      _
    $region23: #{tpu_custom_call.1} parent=1 // pred_check_branch
      %61 = sbr.rel (0) target = $region25
    $region24: #{tpu_custom_call.1} parent=1 // pred_region
      %62 = dma.done [#allocation4], 256
    $region25: #{tpu_custom_call.1} parent=1 // pred_fallthru
      _
    %63 = vsyncpa [#allocation3], 1
    %64 = vsyncpa [#allocation6], 1
    %65 = vsyncpa [#allocation4], 1

</llo_original>
